<compile_context>
chip_gen: v7x
topology: tpu7x:2x2x1
jax: 0.10.0
libtpu: 0.0.40
codegen_flags: <defaults>
</compile_context>

<pallas_src>
import functools

import jax
import jax.numpy as jnp
from jax.experimental import pallas as pl
from jax.experimental.pallas import tpu as pltpu


# ----------------------------------------------------------------------------
# center_padding (matches the PyTorch helper exactly)
# ----------------------------------------------------------------------------
def center_padding(images, patch_size):
    _, _, h, w = images.shape
    diff_h = h % patch_size
    diff_w = w % patch_size
    if diff_h == 0 and diff_w == 0:
        return images
    pad_h = patch_size - diff_h
    pad_w = patch_size - diff_w
    pad_t = pad_h // 2
    pad_l = pad_w // 2
    pad_r = pad_w - pad_l
    pad_b = pad_h - pad_t
    return jnp.pad(images, ((0, 0), (0, 0), (pad_t, pad_b), (pad_l, pad_r)))


# ----------------------------------------------------------------------------
# Kernel 1: tiled linear (patch embedding = Conv2d with kernel==stride==P)
# ----------------------------------------------------------------------------
def linear_kernel(x_ref, w_ref, b_ref, o_ref):
    # native-dtype operands into the MXU, f32 accumulation
    y = jnp.dot(x_ref[...], w_ref[...], preferred_element_type=jnp.float32)
    y = y + b_ref[...].astype(jnp.float32)
    o_ref[...] = y.astype(o_ref.dtype)


def _pick_tile_m(m, target=256):
    """Largest divisor of m that is <= target and a multiple of 8 (f32 sublane)."""
    if m <= target:
        return m
    for t in range(target, 7, -1):
        if m % t == 0 and t % 8 == 0:
            return t
    return m


def pallas_linear(x2d, w, b):
    M, K = x2d.shape
    N = w.shape[1]
    tm = _pick_tile_m(M)
    return pl.pallas_call(
        linear_kernel,
        out_shape=jax.ShapeDtypeStruct((M, N), x2d.dtype),
        grid_spec=pltpu.PrefetchScalarGridSpec(
            num_scalar_prefetch=0,
            grid=(M // tm,),
            in_specs=[
                pl.BlockSpec((tm, K), lambda i: (i, 0)),
                pl.BlockSpec((K, N), lambda i: (0, 0)),
                pl.BlockSpec((1, N), lambda i: (0, 0)),
            ],
            out_specs=pl.BlockSpec((tm, N), lambda i: (i, 0)),
        ),
        compiler_params=pltpu.CompilerParams(
            dimension_semantics=("parallel",)),
    )(x2d, w, b.reshape(1, N))


# ----------------------------------------------------------------------------
# Kernel 2: fused transformer block (one batch element per grid step)
# ----------------------------------------------------------------------------
def block_kernel(x_ref,
                 g1_ref, b1_ref,
                 wqkv_ref, bqkv_ref,
                 wproj_ref, bproj_ref,
                 g2_ref, b2_ref,
                 wfc1_ref, bfc1_ref,
                 wfc2_ref, bfc2_ref,
                 o_ref, *, num_heads):
    x = x_ref[0]                                  # (T, D) native dtype
    T, D = x.shape
    hd = D // num_heads
    scale = hd ** -0.5
    dt = x.dtype

    xf = x.astype(jnp.float32)

    # ---- LayerNorm 1 (f32 statistics, eps=1e-6) ----
    mu = jnp.mean(xf, axis=-1, keepdims=True)
    xc = xf - mu
    var = jnp.mean(xc * xc, axis=-1, keepdims=True)
    h1 = xc * jax.lax.rsqrt(var + 1e-6)
    h1 = h1 * g1_ref[...].astype(jnp.float32) + b1_ref[...].astype(jnp.float32)
    h1 = h1.astype(dt)

    # ---- QKV projection (MXU, f32 accumulate) ----
    qkv = jnp.dot(h1, wqkv_ref[...], preferred_element_type=jnp.float32)
    qkv = qkv + bqkv_ref[...].astype(jnp.float32)          # (T, 3D) f32
    q = (qkv[:, :D] * scale).astype(dt)
    k = qkv[:, D:2 * D].astype(dt)
    v = qkv[:, 2 * D:].astype(dt)

    # ---- multi-head attention; output projection folded into the head loop:
    #      concat_h(o_h) @ Wproj == sum_h o_h @ Wproj[h*hd:(h+1)*hd, :]
    attn_proj = jnp.zeros((T, D), jnp.float32)
    for hi in range(num_heads):
        qh = q[:, hi * hd:(hi + 1) * hd]
        kh = k[:, hi * hd:(hi + 1) * hd]
        vh = v[:, hi * hd:(hi + 1) * hd]
        s = jax.lax.dot_general(qh, kh, (((1,), (1,)), ((), ())),
                                preferred_element_type=jnp.float32)   # (T, T)
        s = s - jnp.max(s, axis=-1, keepdims=True)
        p = jnp.exp(s)
        p = p / jnp.sum(p, axis=-1, keepdims=True)
        oh = jnp.dot(p.astype(dt), vh,
                     preferred_element_type=jnp.float32)              # (T, hd)
        wproj_h = wproj_ref[hi * hd:(hi + 1) * hd, :]                 # (hd, D)
        attn_proj = attn_proj + jnp.dot(oh.astype(dt), wproj_h,
                                        preferred_element_type=jnp.float32)
    attn_out = attn_proj + bproj_ref[...].astype(jnp.float32)

    # ---- residual 1 ----
    x1 = xf + attn_out                                                # (T, D) f32

    # ---- LayerNorm 2 ----
    mu2 = jnp.mean(x1, axis=-1, keepdims=True)
    xc2 = x1 - mu2
    var2 = jnp.mean(xc2 * xc2, axis=-1, keepdims=True)
    h2 = xc2 * jax.lax.rsqrt(var2 + 1e-6)
    h2 = h2 * g2_ref[...].astype(jnp.float32) + b2_ref[...].astype(jnp.float32)
    h2 = h2.astype(dt)

    # ---- MLP: fc1 -> GELU (tanh approx, EUP-friendly) -> fc2 ----
    m = jnp.dot(h2, wfc1_ref[...], preferred_element_type=jnp.float32)
    m = m + bfc1_ref[...].astype(jnp.float32)
    m = jax.nn.gelu(m, approximate=True)
    m = jnp.dot(m.astype(dt), wfc2_ref[...], preferred_element_type=jnp.float32)
    m = m + bfc2_ref[...].astype(jnp.float32)

    # ---- residual 2 + store ----
    o_ref[0] = (x1 + m).astype(o_ref.dtype)


def transformer_block(x, p, num_heads):
    B, T, D = x.shape
    Dh = p["wfc1"].shape[1]
    itemsize = jnp.dtype(x.dtype).itemsize

    flops = (2 * B * T * D * (3 * D + D + 2 * Dh)
             + 4 * B * num_heads * T * T * (D // num_heads))
    transcendentals = B * T * (Dh + num_heads * T)
    bytes_accessed = itemsize * (2 * B * T * D + 4 * D * D + 2 * D * Dh
                                 + 6 * D + Dh)

    kern = functools.partial(block_kernel, num_heads=num_heads)
    const = lambda b: (0, 0)
    return pl.pallas_call(
        kern,
        out_shape=jax.ShapeDtypeStruct((B, T, D), x.dtype),
        grid_spec=pltpu.PrefetchScalarGridSpec(
            num_scalar_prefetch=0,
            grid=(B,),
            in_specs=[
                pl.BlockSpec((1, T, D), lambda b: (b, 0, 0)),   # x
                pl.BlockSpec((1, D), const),                    # ln1 gamma
                pl.BlockSpec((1, D), const),                    # ln1 beta
                pl.BlockSpec((D, 3 * D), const),                # qkv weight
                pl.BlockSpec((1, 3 * D), const),                # qkv bias
                pl.BlockSpec((D, D), const),                    # proj weight
                pl.BlockSpec((1, D), const),                    # proj bias
                pl.BlockSpec((1, D), const),                    # ln2 gamma
                pl.BlockSpec((1, D), const),                    # ln2 beta
                pl.BlockSpec((D, Dh), const),                   # fc1 weight
                pl.BlockSpec((1, Dh), const),                   # fc1 bias
                pl.BlockSpec((Dh, D), const),                   # fc2 weight
                pl.BlockSpec((1, D), const),                    # fc2 bias
            ],
            out_specs=pl.BlockSpec((1, T, D), lambda b: (b, 0, 0)),
        ),
        compiler_params=pltpu.CompilerParams(
            dimension_semantics=("parallel",)),
        cost_estimate=pl.CostEstimate(flops=int(flops),
                                      transcendentals=int(transcendentals),
                                      bytes_accessed=int(bytes_accessed)),
    )(x,
      p["g1"].reshape(1, D), p["b1"].reshape(1, D),
      p["wqkv"], p["bqkv"].reshape(1, 3 * D),
      p["wproj"], p["bproj"].reshape(1, D),
      p["g2"].reshape(1, D), p["b2"].reshape(1, D),
      p["wfc1"], p["bfc1"].reshape(1, Dh),
      p["wfc2"], p["bfc2"].reshape(1, D))


# ----------------------------------------------------------------------------
# Full DINO forward (output='dense', last layer)
# ----------------------------------------------------------------------------
def dino_forward(images, params, *, patch_size, num_heads):
    imgs = center_padding(images, patch_size)
    B, C, H, W = imgs.shape
    hh, ww = H // patch_size, W // patch_size
    num_patches = hh * ww
    D = params["patch_w"].shape[1]

    # patch embedding: Conv2d(k=s=P)  ==  unfold + matmul   (Pallas kernel 1)
    patches = imgs.reshape(B, C, hh, patch_size, ww, patch_size)
    patches = patches.transpose(0, 2, 4, 1, 3, 5).reshape(
        B * num_patches, C * patch_size * patch_size)
    tok = pallas_linear(patches, params["patch_w"], params["patch_b"])
    tok = tok.reshape(B, num_patches, D)

    # prepare_tokens: prepend CLS, add positional embedding (layout plumbing)
    cls = jnp.broadcast_to(params["cls"], (B, 1, D))
    x = jnp.concatenate([cls, tok], axis=1) + params["pos"]

    # transformer blocks (Pallas kernel 2, one fused call per block)
    for blk in params["blocks"]:
        x = transformer_block(x, blk, num_heads)

    # 'dense' output: spatial tokens -> (B, D, h, w)
    spatial = x[:, -num_patches:]
    return spatial.reshape(B, hh, ww, D).transpose(0, 3, 1, 2)


# ----------------------------------------------------------------------------
# Deterministic parameter init (pretrained torch.hub weights not available)
# ----------------------------------------------------------------------------
def init_params(key, in_chans, patch_size, num_patches, D, depth, num_heads,
                mlp_ratio=4, dtype=jnp.float32):
    Dh = D * mlp_ratio
    Kp = in_chans * patch_size * patch_size
    keys = jax.random.split(key, 4 + depth)

    def rnd(k, shape):
        return (jax.random.normal(k, shape) * 0.02).astype(dtype)

    params = {
        "patch_w": rnd(keys[0], (Kp, D)),
        "patch_b": rnd(keys[1], (D,)),
        "cls": rnd(keys[2], (1, 1, D)),
        "pos": rnd(keys[3], (1, 1 + num_patches, D)),
        "blocks": [],
    }
    for i in range(depth):
        ks = jax.random.split(keys[4 + i], 8)
        params["blocks"].append({
            "g1": jnp.ones((D,), dtype), "b1": jnp.zeros((D,), dtype),
            "wqkv": rnd(ks[0], (D, 3 * D)), "bqkv": rnd(ks[1], (3 * D,)),
            "wproj": rnd(ks[2], (D, D)), "bproj": rnd(ks[3], (D,)),
            "g2": jnp.ones((D,), dtype), "b2": jnp.zeros((D,), dtype),
            "wfc1": rnd(ks[4], (D, Dh)), "bfc1": rnd(ks[5], (Dh,)),
            "wfc2": rnd(ks[6], (Dh, D)), "bfc2": rnd(ks[7], (D,)),
        })
    return params


# ----------------------------------------------------------------------------
# Pure-JAX reference for the correctness check
# ----------------------------------------------------------------------------
def _ref_block(x, p, num_heads):
    B, T, D = x.shape
    hd = D // num_heads

    def ln(z, g, b):
        mu = z.mean(-1, keepdims=True)
        v = ((z - mu) ** 2).mean(-1, keepdims=True)
        return (z - mu) * jax.lax.rsqrt(v + 1e-6) * g + b

    h1 = ln(x, p["g1"], p["b1"])
    qkv = h1 @ p["wqkv"] + p["bqkv"]
    q, k, v = qkv[..., :D], qkv[..., D:2 * D], qkv[..., 2 * D:]
    q = q.reshape(B, T, num_heads, hd).transpose(0, 2, 1, 3)
    k = k.reshape(B, T, num_heads, hd).transpose(0, 2, 1, 3)
    v = v.reshape(B, T, num_heads, hd).transpose(0, 2, 1, 3)
    s = jnp.einsum("bhtd,bhsd->bhts", q, k) * (hd ** -0.5)
    a = jax.nn.softmax(s, axis=-1)
    o = jnp.einsum("bhts,bhsd->bhtd", a, v).transpose(0, 2, 1, 3).reshape(B, T, D)
    x = x + (o @ p["wproj"] + p["bproj"])
    h2 = ln(x, p["g2"], p["b2"])
    m = jax.nn.gelu(h2 @ p["wfc1"] + p["bfc1"], approximate=True)
    return x + (m @ p["wfc2"] + p["bfc2"])


def reference_forward(images, params, *, patch_size, num_heads):
    imgs = center_padding(images, patch_size)
    B, C, H, W = imgs.shape
    hh, ww = H // patch_size, W // patch_size
    num_patches = hh * ww
    D = params["patch_w"].shape[1]
    patches = imgs.reshape(B, C, hh, patch_size, ww, patch_size)
    patches = patches.transpose(0, 2, 4, 1, 3, 5).reshape(
        B, num_patches, C * patch_size * patch_size)
    x = patches @ params["patch_w"] + params["patch_b"]
    x = jnp.concatenate(
        [jnp.broadcast_to(params["cls"], (B, 1, D)), x], axis=1) + params["pos"]
    for blk in params["blocks"]:
        x = _ref_block(x, blk, num_heads)
    spatial = x[:, -num_patches:]
    return spatial.reshape(B, hh, ww, D).transpose(0, 3, 1, 2)


if __name__ == "__main__":
    # small, DINO-consistent shapes: RGB images, ViT-style backbone
    B, C, H, W = 2, 3, 16, 16
    patch_size = 8
    embed_dim = 64
    depth = 2
    num_heads = 4
    mlp_ratio = 4

    key = jax.random.PRNGKey(0)
    kimg, kparam = jax.random.split(key)
    images = jax.random.normal(kimg, (B, C, H, W), dtype=jnp.float32)

    hh, ww = H // patch_size, W // patch_size
    params = init_params(kparam, C, patch_size, hh * ww, embed_dim, depth,
                         num_heads, mlp_ratio)

    out = dino_forward(images, params, patch_size=patch_size,
                       num_heads=num_heads)
    out = jax.block_until_ready(out)

    ref = reference_forward(images, params, patch_size=patch_size,
                            num_heads=num_heads)
    ref = jax.block_until_ready(ref)

    assert out.shape == (B, embed_dim, hh, ww), out.shape
    assert jnp.allclose(out, ref, atol=1e-4, rtol=1e-4), float(
        jnp.max(jnp.abs(out - ref)))

    print("KERNEL_OK")
</pallas_src>

<mosaic_0001>
module attributes {stable_mosaic.version = 11 : i64} {
  func.func @linear_kernel(%arg0: i32, %arg1: memref<8x192xf32, #tpu.memory_space<vmem>>, %arg2: memref<192x64xf32, #tpu.memory_space<vmem>>, %arg3: memref<1x64xf32, #tpu.memory_space<vmem>>, %arg4: memref<8x64xf32, #tpu.memory_space<vmem>>) attributes {dimension_semantics = [#tpu.dimension_semantics<parallel>], iteration_bounds = array<i64: 1>, scalar_prefetch = 0 : i64, scratch_operands = 0 : i64, tpu.core_type = #tpu.core_type<tc>, window_params = [{transform_indices = @transform_0, window_bounds = array<i64: 8, 192>}, {pipeline_mode = #tpu.pipeline_mode<synchronous>, transform_indices = @transform_1, window_bounds = array<i64: 192, 64>}, {pipeline_mode = #tpu.pipeline_mode<synchronous>, transform_indices = @transform_2, window_bounds = array<i64: 1, 64>}, {transform_indices = @transform_3, window_bounds = array<i64: 8, 64>}]} {
    %c0 = arith.constant 0 : index
    %c0_0 = arith.constant 0 : index
    %0 = vector.load %arg1[%c0, %c0_0] : memref<8x192xf32, #tpu.memory_space<vmem>>, vector<8x192xf32>
    %c0_1 = arith.constant 0 : index
    %c0_2 = arith.constant 0 : index
    %1 = vector.load %arg2[%c0_1, %c0_2] : memref<192x64xf32, #tpu.memory_space<vmem>>, vector<192x64xf32>
    %cst = arith.constant dense<0.000000e+00> : vector<8x64xf32>
    %2 = tpu.matmul %0, %1, %cst {dimension_numbers = #tpu.dot_dimension_numbers<[1], [0], [0], [1], [0, 0, 1, 1], [], []>} : vector<8x192xf32>, vector<192x64xf32>, vector<8x64xf32> -> vector<8x64xf32>
    %c0_3 = arith.constant 0 : index
    %c0_4 = arith.constant 0 : index
    %3 = vector.load %arg3[%c0_3, %c0_4] : memref<1x64xf32, #tpu.memory_space<vmem>>, vector<1x64xf32>
    %4 = vector.broadcast %3 : vector<1x64xf32> to vector<8x64xf32>
    %5 = arith.addf %2, %4 : vector<8x64xf32>
    %c0_5 = arith.constant 0 : index
    %c0_6 = arith.constant 0 : index
    %6 = vector.load %arg4[%c0_5, %c0_6] : memref<8x64xf32, #tpu.memory_space<vmem>>, vector<8x64xf32>
    tpu.vector_store %arg4[%c0_5, %c0_6], %5 {strides = array<i32>} : memref<8x64xf32, #tpu.memory_space<vmem>>, vector<8x64xf32>,
    return
  }
  func.func @transform_0(%arg0: i32) -> (i32, i32) {
    %c0_i32 = arith.constant 0 : i32
    %c0_i32_0 = arith.constant 0 : i32
    return %arg0, %c0_i32 : i32, i32
  }
  func.func @transform_1(%arg0: i32) -> (i32, i32) {
    %c0_i32 = arith.constant 0 : i32
    %c0_i32_0 = arith.constant 0 : i32
    %c0_i32_1 = arith.constant 0 : i32
    return %c0_i32, %c0_i32_0 : i32, i32
  }
  func.func @transform_2(%arg0: i32) -> (i32, i32) {
    %c0_i32 = arith.constant 0 : i32
    %c0_i32_0 = arith.constant 0 : i32
    %c0_i32_1 = arith.constant 0 : i32
    return %c0_i32, %c0_i32_0 : i32, i32
  }
  func.func @transform_3(%arg0: i32) -> (i32, i32) {
    %c0_i32 = arith.constant 0 : i32
    %c0_i32_0 = arith.constant 0 : i32
    return %arg0, %c0_i32 : i32, i32
  }
}

</mosaic_0001>

<llo_original>
// kernel: tpu_custom_call.1
$region0: #{tpu_custom_call.1}
  #allocation0 [shape = 'u32[]', space=smem, size = 0x4, offset = 0x4, fixed_abs, tag = 'smem constant byte address 0x4 - core index']
  #allocation1 [shape = 'u32[144,128]{1,0:T(1,128)}', space=vmem, size = 0x12000, scoped, tag = 'internal scratch']
  %s0 = inlined_call_operand.vmem [shape: f32[8,192], index: 0, kind: input, shape index: {}]
  %s1 = inlined_call_operand.vmem [shape: f32[192,64], index: 1, kind: input, shape index: {}]
  %s2 = inlined_call_operand.vmem [shape: f32[1,64], index: 2, kind: input, shape index: {}]
  %s3 = inlined_call_operand.hbm [shape: f32[8,64], index: 3, kind: output, shape index: {}]
  %s4 = sld [smem:[#allocation0]]
  $region22: #{tpu_custom_call.1} parent=0
    _
  %s6 = ssub.s32 1, %s4
  %s7 = scalar_select 0, %s6, %s4
  $region1: #{tpu_custom_call.1} parent=0
    #allocation2 [shape = 'u8[4096]{0}', space=vmem, size = 0x1000, scoped, tag = 'output window, operand 0, single buffered']
    #allocation3 [shape = 's32[1]{0}', space=sflag, size = 0x4, scoped, tag = 'scoped memory for tpu_custom_call.1']
    %8 = vsyncpa [#allocation3], 0
    // Predicated region
    $region2: #{tpu_custom_call.1} parent=1 // pred_check
      _
    $region3: #{tpu_custom_call.1} parent=1 // pred_check_branch
      %10 = sbr.rel (0) target = $region5
    $region4: #{tpu_custom_call.1} parent=1 // pred_region
      _
    $region5: #{tpu_custom_call.1} parent=1 // pred_fallthru
      _
    // Predicated region
    $region6: #{tpu_custom_call.1} parent=1 // pred_check
      _
    $region7: #{tpu_custom_call.1} parent=1 // pred_check_branch
      %12 = sbr.rel (0) target = $region9
    $region8: #{tpu_custom_call.1} parent=1 // pred_region
      _
    $region9: #{tpu_custom_call.1} parent=1 // pred_fallthru
      _
    // Predicated region
    $region10: #{tpu_custom_call.1} parent=1 // pred_check
      _
    $region11: #{tpu_custom_call.1} parent=1 // pred_check_branch
      %14 = sbr.rel (0) target = $region13
    $region12: #{tpu_custom_call.1} parent=1 // pred_region
      _
    $region13: #{tpu_custom_call.1} parent=1 // pred_fallthru
      _
    %v15 = vld [vmem:[%s0] sm:$0xff]
    %v16 = vld [vmem:[%s0 + $0x8] sm:$0xff]
    %v17 = vld [vmem:[%s1] sm:$0xff]
    %v18 = vld [vmem:[%s1 + $0x8] sm:$0xff]
    %v19 = vld [vmem:[%s1 + $0x10] sm:$0xff]
    %v20 = vld [vmem:[%s1 + $0x18] sm:$0xff]
    %v21 = vld [vmem:[%s1 + $0x20] sm:$0xff]
    %v22 = vld [vmem:[%s1 + $0x28] sm:$0xff]
    %v23 = vld [vmem:[%s1 + $0x30] sm:$0xff]
    %v24 = vld [vmem:[%s1 + $0x38] sm:$0xff]
    %v25 = vld [vmem:[%s1 + $0x40] sm:$0xff]
    %v26 = vld [vmem:[%s1 + $0x48] sm:$0xff]
    %v27 = vld [vmem:[%s1 + $0x50] sm:$0xff]
    %v28 = vld [vmem:[%s1 + $0x58] sm:$0xff]
    %v29 = vld [vmem:[%s1 + $0x60] sm:$0xff]
    %v30 = vld [vmem:[%s1 + $0x68] sm:$0xff]
    %v31 = vld [vmem:[%s1 + $0x70] sm:$0xff]
    %v32 = vld [vmem:[%s1 + $0x78] sm:$0xff]
    %v33 = vld [vmem:[%s1 + $0x80] sm:$0xff]
    %v34 = vld [vmem:[%s1 + $0x88] sm:$0xff]
    %v35 = vld [vmem:[%s1 + $0x90] sm:$0xff]
    %v36 = vld [vmem:[%s1 + $0x98] sm:$0xff]
    %v37 = vld [vmem:[%s1 + $0xa0] sm:$0xff]
    %v38 = vld [vmem:[%s1 + $0xa8] sm:$0xff]
    %v39 = vld [vmem:[%s1 + $0xb0] sm:$0xff]
    %v40 = vld [vmem:[%s1 + $0xb8] sm:$0xff]
    %v41 = vld [vmem:[%s2] sm:$0x1]
    %v43 = vlaneseq
    %v44 = vshrl.u32 %v43, 7
    %v45 = vsub.s32 0, %v44
    %v46 = vrot.slane %v41, %v45
    %vm48 = vcmask 523264
    %v50 = vsel %vm48, %v16, 0
    %52 = vmatprep.subr.mxu0 0.0
    %53 = vmatpush1.msra.mxu0 %v17
    %54 = vmatprep.subr.mxu0 0.0
    %55 = vmatpush1.msra.mxu0 %v18
    %56 = vmatprep.subr.mxu0 0.0
    %57 = vmatpush1.msra.mxu0 %v19
    %58 = vmatprep.subr.mxu0 0.0
    %59 = vmatpush1.msra.mxu0 %v20
    %60 = vmatprep.subr.mxu0 0.0
    %61 = vmatpush1.msra.mxu0 %v21
    %62 = vmatprep.subr.mxu0 0.0
    %63 = vmatpush1.msra.mxu0 %v22
    %64 = vmatprep.subr.mxu0 0.0
    %65 = vmatpush1.msra.mxu0 %v23
    %66 = vmatprep.subr.mxu0 0.0
    %67 = vmatpush1.msra.mxu0 %v24
    %68 = vmatprep.subr.mxu0 0.0
    %69 = vmatpush1.msra.mxu0 %v25
    %70 = vmatprep.subr.mxu0 0.0
    %71 = vmatpush1.msra.mxu0 %v26
    %72 = vmatprep.subr.mxu0 0.0
    %73 = vmatpush1.msra.mxu0 %v27
    %74 = vmatprep.subr.mxu0 0.0
    %75 = vmatpush1.msra.mxu0 %v28
    %76 = vmatprep.subr.mxu0 0.0
    %77 = vmatpush1.msra.mxu0 %v29
    %78 = vmatprep.subr.mxu0 0.0
    %79 = vmatpush1.msra.mxu0 %v30
    %80 = vmatprep.subr.mxu0 0.0
    %81 = vmatpush1.msra.mxu0 %v31
    %82 = vmatprep.subr.mxu0 0.0
    %83 = vmatpush1.msra.mxu0 %v32
    %84 = vmatprep.subr.mxu0 0.0
    %85 = vmatpush1.msra.mxu0 %v33
    %86 = vmatprep.subr.mxu0 0.0
    %87 = vmatpush1.msra.mxu0 %v34
    %88 = vmatprep.subr.mxu0 0.0
    %89 = vmatpush1.msra.mxu0 %v35
    %90 = vmatprep.subr.mxu0 0.0
    %91 = vmatpush1.msra.mxu0 %v36
    %92 = vmatprep.subr.mxu0 0.0
    %93 = vmatpush1.msra.mxu0 %v37
    %94 = vmatprep.subr.mxu0 0.0
    %95 = vmatpush1.msra.mxu0 %v38
    %96 = vmatprep.subr.mxu0 0.0
    %97 = vmatpush1.msra.mxu0 %v39
    %98 = vmatprep.subr.mxu0 0.0
    %99 = vmatpush1.msra.mxu0 %v40
    %100 = vmatprep.subr.mxu0 0.0
    %101 = vmatpush1.msra.mxu0 0.0
    %102 = vmatprep.subr.mxu0 0.0
    %103 = vmatpush1.msra.mxu0 0.0
    %104 = vmatprep.subr.mxu0 0.0
    %105 = vmatpush1.msra.mxu0 0.0
    %106 = vmatprep.subr.mxu0 0.0
    %107 = vmatpush1.msra.mxu0 0.0
    %108 = vmatprep.subr.mxu0 0.0
    %109 = vmatpush1.msra.mxu0 0.0
    %110 = vmatprep.subr.mxu0 0.0
    %111 = vmatpush1.msra.mxu0 0.0
    %112 = vmatprep.subr.mxu0 0.0
    %113 = vmatpush1.msra.mxu0 0.0
    %114 = vmatprep.subr.mxu0 0.0
    %115 = vmatpush1.msra.mxu0 0.0
    %116 = vmatprep.mubr.f32.mxu0 %v50
    %117 = vmatmul.mubr.f32.gmra.mrb[0].mxu0 %v15
    %v118 = vpop.f32.mrb[0].mxu0
    %v119 = vadd.f32 %v46, %v118
    %v120 = vpop.f32.mrb[0].mxu0
    %121 = vdwg.mxu0
    %122 = vst.msk [vmem:[#allocation2] sm:$0xff] %vm48, %v119
    // Predicated region
    $region14: #{tpu_custom_call.1} parent=1 // pred_check
      _
    $region15: #{tpu_custom_call.1} parent=1 // pred_check_branch
      %124 = sbr.rel (0) target = $region17
    $region16: #{tpu_custom_call.1} parent=1 // pred_region
      %s126 = ssub.s32 128, 128
      %127 = vsyncadd [#allocation3], %s126
      %s129 = sshll.u32 [#allocation2], 4
      %s130 = int_to_ptr.vmem [resolvable:$true] %s129
      %132 = dma.vmem_to_hbm [thread:$0]  %s130, 128, %s3, [#allocation3]
    $region17: #{tpu_custom_call.1} parent=1 // pred_fallthru
      _
    // Predicated region
    $region18: #{tpu_custom_call.1} parent=1 // pred_check
      _
    $region19: #{tpu_custom_call.1} parent=1 // pred_check_branch
      %134 = sbr.rel (0) target = $region21
    $region20: #{tpu_custom_call.1} parent=1 // pred_region
      %135 = dma.done [#allocation3], 128
    $region21: #{tpu_custom_call.1} parent=1 // pred_fallthru
      _
    %136 = vsyncpa [#allocation3], 1

</llo_original>
